<compile_context>
chip_gen: v7x
topology: tpu7x:2x2x1
jax: 0.10.0
libtpu: 0.0.40
codegen_flags: <defaults>
</compile_context>

<pallas_src>
import jax
import jax.numpy as jnp
from jax.experimental import pallas as pl
from jax.experimental.pallas import tpu as pltpu

# --- "cfg" values (synthetic, small) -----------------------------------------
TEXT_DIM = 32        # cfg.TextDim
COND_DIM = 16        # cfg.ConditionDim
BATCH = 8


def _ca_kernel(emb_ref, w_ref, b_ref, eps_ref, c_ref, mu_ref, var_ref):
    """Fused Linear + ReLU + reparameterization.

    emb_ref: (B, T)      w_ref: (T, 2C)     b_ref: (1, 2C)
    eps_ref: (B, C)      c_ref/mu_ref/var_ref: (B, C)
    """
    C = mu_ref.shape[-1]

    # Single merged matmul for both heads (one MXU push, one bias-add, one ReLU).
    out = jnp.dot(emb_ref[...], w_ref[...],
                  preferred_element_type=jnp.float32) + b_ref[...]
    out = jnp.maximum(out, 0.0)

    # Static lane slices at offset C (2C = 32 columns fit in one vreg lane group).
    mu = out[:, :C]
    var = out[:, C:]

    # Reparameterization: c = eps * exp(0.5 * var) + mu
    c = eps_ref[...] * jnp.exp(0.5 * var) + mu

    c_ref[...] = c.astype(c_ref.dtype)
    mu_ref[...] = mu.astype(mu_ref.dtype)
    var_ref[...] = var.astype(var_ref.dtype)


@jax.jit
def conditioning_augment(embeddings, weight_t, bias, eps):
    """embeddings: (B, T) f32; weight_t: (T, 2C) f32 (PyTorch weight transposed);
    bias: (1, 2C) f32; eps: (B, C) f32.

    Returns (c, mu, var), each (B, C) f32.
    """
    B, T = embeddings.shape
    two_c = weight_t.shape[1]
    C = two_c // 2
    assert eps.shape == (B, C)

    flops = 2 * B * T * two_c + 6 * B * C
    bytes_accessed = 4 * (B * T + T * two_c + two_c + B * C + 3 * B * C)

    vmem_spec = pl.BlockSpec(memory_space=pltpu.MemorySpace.VMEM)

    c, mu, var = pl.pallas_call(
        _ca_kernel,
        out_shape=(
            jax.ShapeDtypeStruct((B, C), jnp.float32),
            jax.ShapeDtypeStruct((B, C), jnp.float32),
            jax.ShapeDtypeStruct((B, C), jnp.float32),
        ),
        in_specs=[vmem_spec, vmem_spec, vmem_spec, vmem_spec],
        out_specs=(vmem_spec, vmem_spec, vmem_spec),
        cost_estimate=pl.CostEstimate(
            flops=flops,
            transcendentals=B * C,
            bytes_accessed=bytes_accessed,
        ),
    )(embeddings, weight_t, bias, eps)

    return c, mu, var


def _reference(embeddings, weight_t, bias, eps):
    out = embeddings @ weight_t + bias
    out = jnp.maximum(out, 0.0)
    C = out.shape[1] // 2
    mu = out[:, :C]
    var = out[:, C:]
    std = jnp.exp(0.5 * var)
    return eps * std + mu, mu, var


if __name__ == "__main__":
    key = jax.random.PRNGKey(0)
    k_emb, k_w, k_b, k_eps = jax.random.split(key, 4)

    # Deterministic synthetic parameters (nn.Linear(tDim, 2*cDim) shapes).
    embeddings = jax.random.normal(k_emb, (BATCH, TEXT_DIM), dtype=jnp.float32)
    weight_t = jax.random.normal(k_w, (TEXT_DIM, 2 * COND_DIM), dtype=jnp.float32) * 0.1
    bias = jax.random.normal(k_b, (1, 2 * COND_DIM), dtype=jnp.float32) * 0.1
    eps = jax.random.normal(k_eps, (BATCH, COND_DIM), dtype=jnp.float32)

    c, mu, var = conditioning_augment(embeddings, weight_t, bias, eps)
    jax.block_until_ready((c, mu, var))

    c_ref, mu_ref, var_ref = _reference(embeddings, weight_t, bias, eps)
    assert jnp.allclose(c, c_ref, atol=1e-5, rtol=1e-5)
    assert jnp.allclose(mu, mu_ref, atol=1e-5, rtol=1e-5)
    assert jnp.allclose(var, var_ref, atol=1e-5, rtol=1e-5)

    print("KERNEL_OK")
</pallas_src>

<mosaic_0001>
module attributes {stable_mosaic.version = 11 : i64} {
  func.func @_ca_kernel(%arg0: memref<8x32xf32, #tpu.memory_space<vmem>>, %arg1: memref<32x32xf32, #tpu.memory_space<vmem>>, %arg2: memref<1x32xf32, #tpu.memory_space<vmem>>, %arg3: memref<8x16xf32, #tpu.memory_space<vmem>>, %arg4: memref<8x16xf32, #tpu.memory_space<vmem>>, %arg5: memref<8x16xf32, #tpu.memory_space<vmem>>, %arg6: memref<8x16xf32, #tpu.memory_space<vmem>>) attributes {dimension_semantics = [], scalar_prefetch = 0 : i64, scratch_operands = 0 : i64, tpu.core_type = #tpu.core_type<tc>} {
    %c0 = arith.constant 0 : index
    %c0_0 = arith.constant 0 : index
    %0 = vector.load %arg0[%c0, %c0_0] : memref<8x32xf32, #tpu.memory_space<vmem>>, vector<8x32xf32>
    %c0_1 = arith.constant 0 : index
    %c0_2 = arith.constant 0 : index
    %1 = vector.load %arg1[%c0_1, %c0_2] : memref<32x32xf32, #tpu.memory_space<vmem>>, vector<32x32xf32>
    %cst = arith.constant dense<0.000000e+00> : vector<8x32xf32>
    %2 = tpu.matmul %0, %1, %cst {dimension_numbers = #tpu.dot_dimension_numbers<[1], [0], [0], [1], [0, 0, 1, 1], [], []>} : vector<8x32xf32>, vector<32x32xf32>, vector<8x32xf32> -> vector<8x32xf32>
    %c0_3 = arith.constant 0 : index
    %c0_4 = arith.constant 0 : index
    %3 = vector.load %arg2[%c0_3, %c0_4] : memref<1x32xf32, #tpu.memory_space<vmem>>, vector<1x32xf32>
    %4 = vector.broadcast %3 : vector<1x32xf32> to vector<8x32xf32>
    %5 = arith.addf %2, %4 : vector<8x32xf32>
    %cst_5 = arith.constant 0.000000e+00 : f32
    %6 = vector.broadcast %cst_5 : f32 to vector<8x32xf32>
    %7 = arith.maximumf %5, %6 : vector<8x32xf32>
    %8 = vector.extract_strided_slice %7 {offsets = [0, 0], sizes = [8, 16], strides = [1, 1]} : vector<8x32xf32> to vector<8x16xf32>
    %9 = vector.extract_strided_slice %7 {offsets = [0, 16], sizes = [8, 16], strides = [1, 1]} : vector<8x32xf32> to vector<8x16xf32>
    %c0_6 = arith.constant 0 : index
    %c0_7 = arith.constant 0 : index
    %10 = vector.load %arg3[%c0_6, %c0_7] : memref<8x16xf32, #tpu.memory_space<vmem>>, vector<8x16xf32>
    %cst_8 = arith.constant 5.000000e-01 : f32
    %11 = vector.broadcast %cst_8 : f32 to vector<8x16xf32>
    %12 = arith.mulf %11, %9 : vector<8x16xf32>
    %13 = math.exp %12 : vector<8x16xf32>
    %14 = arith.mulf %10, %13 : vector<8x16xf32>
    %15 = arith.addf %14, %8 : vector<8x16xf32>
    %c0_9 = arith.constant 0 : index
    %c0_10 = arith.constant 0 : index
    %16 = vector.load %arg4[%c0_9, %c0_10] : memref<8x16xf32, #tpu.memory_space<vmem>>, vector<8x16xf32>
    tpu.vector_store %arg4[%c0_9, %c0_10], %15 {strides = array<i32>} : memref<8x16xf32, #tpu.memory_space<vmem>>, vector<8x16xf32>,
    %c0_11 = arith.constant 0 : index
    %c0_12 = arith.constant 0 : index
    %17 = vector.load %arg5[%c0_11, %c0_12] : memref<8x16xf32, #tpu.memory_space<vmem>>, vector<8x16xf32>
    tpu.vector_store %arg5[%c0_11, %c0_12], %8 {strides = array<i32>} : memref<8x16xf32, #tpu.memory_space<vmem>>, vector<8x16xf32>,
    %c0_13 = arith.constant 0 : index
    %c0_14 = arith.constant 0 : index
    %18 = vector.load %arg6[%c0_13, %c0_14] : memref<8x16xf32, #tpu.memory_space<vmem>>, vector<8x16xf32>
    tpu.vector_store %arg6[%c0_13, %c0_14], %9 {strides = array<i32>} : memref<8x16xf32, #tpu.memory_space<vmem>>, vector<8x16xf32>,
    return
  }
}

</mosaic_0001>

<llo_original>
// kernel: conditioning_augment.1
$region0: #{conditioning_augment.1}
  #allocation0 [shape = 'u32[]', space=smem, size = 0x4, offset = 0x4, fixed_abs, tag = 'smem constant byte address 0x4 - core index']
  #allocation1 [shape = 'u32[144,128]{1,0:T(1,128)}', space=vmem, size = 0x12000, scoped, tag = 'internal scratch']
  %s0 = inlined_call_operand.hbm [shape: f32[8,32], index: 0, kind: input, shape index: {}]
  %s1 = inlined_call_operand.hbm [shape: f32[32,32], index: 1, kind: input, shape index: {}]
  %s2 = inlined_call_operand.vmem [shape: f32[1,32], index: 2, kind: input, shape index: {}]
  %s3 = inlined_call_operand.vmem [shape: f32[8,16], index: 3, kind: input, shape index: {}]
  %s4 = inlined_call_operand.hbm [shape: f32[8,16], index: 4, kind: output, shape index: {0}]
  %s5 = inlined_call_operand.hbm [shape: f32[8,16], index: 5, kind: output, shape index: {1}]
  %s6 = inlined_call_operand.hbm [shape: f32[8,16], index: 6, kind: output, shape index: {2}]
  %7 = xla_tuple %s4, %s5, %s6
  %s8 = sld [smem:[#allocation0]]
  $region50: #{conditioning_augment.1} parent=0
    _
  %s10 = ssub.s32 1, %s8
  %s11 = scalar_select 0, %s10, %s8
  $region1: #{conditioning_augment.1} parent=0
    #allocation2 [shape = 'u8[4096]{0}', space=vmem, size = 0x1000, scoped, tag = 'input window, operand 0, single buffered']
    #allocation3 [shape = 's32[1]{0}', space=sflag, size = 0x4, scoped, tag = 'scoped memory for conditioning_augment.1']
    #allocation4 [shape = 's32[1]{0}', space=sflag, size = 0x4, scoped, tag = 'scoped memory for conditioning_augment.1']
    #allocation5 [shape = 'u8[16384]{0}', space=vmem, size = 0x4000, scoped, tag = 'input window, operand 1, single buffered']
    #allocation6 [shape = 's32[1]{0}', space=sflag, size = 0x4, scoped, tag = 'scoped memory for conditioning_augment.1']
    #allocation7 [shape = 'u8[4096]{0}', space=vmem, size = 0x1000, scoped, tag = 'output window, operand 0, single buffered']
    #allocation8 [shape = 'u8[4096]{0}', space=vmem, size = 0x1000, scoped, tag = 'output window, operand 1, single buffered']
    #allocation9 [shape = 's32[1]{0}', space=sflag, size = 0x4, scoped, tag = 'scoped memory for conditioning_augment.1']
    #allocation10 [shape = 'u8[4096]{0}', space=vmem, size = 0x1000, scoped, tag = 'output window, operand 2, single buffered']
    %12 = vsyncpa [#allocation3], 0
    %13 = vsyncpa [#allocation6], 0
    %14 = vsyncpa [#allocation4], 0
    %15 = vsyncpa [#allocation9], 0
    // Predicated region
    $region2: #{conditioning_augment.1} parent=1 // pred_check
      _
    $region3: #{conditioning_augment.1} parent=1 // pred_check_branch
      %17 = sbr.rel (0) target = $region5
    $region4: #{conditioning_augment.1} parent=1 // pred_region
      %s19 = ssub.s32 128, 128
      %20 = vsyncadd [#allocation3], %s19
      %s22 = sshll.u32 [#allocation2], 4
      %s23 = int_to_ptr.vmem [resolvable:$true] %s22
      %25 = dma.hbm_to_vmem [thread:$0]  %s0, 128, %s23, [#allocation3]
    $region5: #{conditioning_augment.1} parent=1 // pred_fallthru
      _
    // Predicated region
    $region6: #{conditioning_augment.1} parent=1 // pred_check
      _
    $region7: #{conditioning_augment.1} parent=1 // pred_check_branch
      %27 = sbr.rel (0) target = $region9
    $region8: #{conditioning_augment.1} parent=1 // pred_region
      %s29 = ssub.s32 512, 512
      %30 = vsyncadd [#allocation6], %s29
      %s31 = sshll.u32 [#allocation5], 4
      %s32 = int_to_ptr.vmem [resolvable:$true] %s31
      %37 = dma.hbm_to_vmem [thread:$0]  %s1, 512, %s32, [#allocation6], 128, 128, 8
    $region9: #{conditioning_augment.1} parent=1 // pred_fallthru
      _
    // Predicated region
    $region10: #{conditioning_augment.1} parent=1 // pred_check
      _
    $region11: #{conditioning_augment.1} parent=1 // pred_check_branch
      %39 = sbr.rel (0) target = $region13
    $region12: #{conditioning_augment.1} parent=1 // pred_region
      _
    $region13: #{conditioning_augment.1} parent=1 // pred_fallthru
      _
    // Predicated region
    $region14: #{conditioning_augment.1} parent=1 // pred_check
      _
    $region15: #{conditioning_augment.1} parent=1 // pred_check_branch
      %41 = sbr.rel (0) target = $region17
    $region16: #{conditioning_augment.1} parent=1 // pred_region
      _
    $region17: #{conditioning_augment.1} parent=1 // pred_fallthru
      _
    // Predicated region
    $region18: #{conditioning_augment.1} parent=1 // pred_check
      _
    $region19: #{conditioning_augment.1} parent=1 // pred_check_branch
      %43 = sbr.rel (0) target = $region21
    $region20: #{conditioning_augment.1} parent=1 // pred_region
      %44 = dma.done [#allocation3], 128
    $region21: #{conditioning_augment.1} parent=1 // pred_fallthru
      _
    // Predicated region
    $region22: #{conditioning_augment.1} parent=1 // pred_check
      _
    $region23: #{conditioning_augment.1} parent=1 // pred_check_branch
      %46 = sbr.rel (0) target = $region25
    $region24: #{conditioning_augment.1} parent=1 // pred_region
      %47 = dma.done [#allocation6], 512
    $region25: #{conditioning_augment.1} parent=1 // pred_fallthru
      _
    %v48 = vld [vmem:[#allocation2] sm:$0xff]
    %v49 = vld [vmem:[#allocation5] sm:$0xff]
    %v50 = vld [vmem:[#allocation5 + $0x8] sm:$0xff]
    %v51 = vld [vmem:[#allocation5 + $0x10] sm:$0xff]
    %v52 = vld [vmem:[#allocation5 + $0x18] sm:$0xff]
    %v53 = vld [vmem:[%s2] sm:$0x1]
    %v55 = vlaneseq
    %v56 = vshrl.u32 %v55, 7
    %v57 = vsub.s32 0, %v56
    %v58 = vrot.slane %v53, %v57
    %vm60 = vcmask 261120
    %v62 = vsel %vm60, %v48, 0
    %64 = vmatprep.subr.mxu0 0.0
    %65 = vmatpush1.msra.mxu0 %v49
    %66 = vmatprep.subr.mxu0 0.0
    %67 = vmatpush1.msra.mxu0 %v50
    %68 = vmatprep.subr.mxu0 0.0
    %69 = vmatpush1.msra.mxu0 %v51
    %70 = vmatprep.subr.mxu0 0.0
    %71 = vmatpush1.msra.mxu0 %v52
    %72 = vmatprep.subr.mxu0 0.0
    %73 = vmatpush1.msra.mxu0 0.0
    %74 = vmatprep.subr.mxu0 0.0
    %75 = vmatpush1.msra.mxu0 0.0
    %76 = vmatprep.subr.mxu0 0.0
    %77 = vmatpush1.msra.mxu0 0.0
    %78 = vmatprep.subr.mxu0 0.0
    %79 = vmatpush1.msra.mxu0 0.0
    %80 = vmatprep.subr.mxu0 0.0
    %81 = vmatpush1.msra.mxu0 0.0
    %82 = vmatprep.subr.mxu0 0.0
    %83 = vmatpush1.msra.mxu0 0.0
    %84 = vmatprep.subr.mxu0 0.0
    %85 = vmatpush1.msra.mxu0 0.0
    %86 = vmatprep.subr.mxu0 0.0
    %87 = vmatpush1.msra.mxu0 0.0
    %88 = vmatprep.subr.mxu0 0.0
    %89 = vmatpush1.msra.mxu0 0.0
    %90 = vmatprep.subr.mxu0 0.0
    %91 = vmatpush1.msra.mxu0 0.0
    %92 = vmatprep.subr.mxu0 0.0
    %93 = vmatpush1.msra.mxu0 0.0
    %94 = vmatprep.subr.mxu0 0.0
    %95 = vmatpush1.msra.mxu0 0.0
    %96 = vmatprep.subr.mxu0 0.0
    %97 = vmatpush1.msra.mxu0 0.0
    %98 = vmatprep.subr.mxu0 0.0
    %99 = vmatpush1.msra.mxu0 0.0
    %100 = vmatprep.subr.mxu0 0.0
    %101 = vmatpush1.msra.mxu0 0.0
    %102 = vmatprep.subr.mxu0 0.0
    %103 = vmatpush1.msra.mxu0 0.0
    %104 = vmatprep.subr.mxu0 0.0
    %105 = vmatpush1.msra.mxu0 0.0
    %106 = vmatprep.subr.mxu0 0.0
    %107 = vmatpush1.msra.mxu0 0.0
    %108 = vmatprep.subr.mxu0 0.0
    %109 = vmatpush1.msra.mxu0 0.0
    %110 = vmatprep.subr.mxu0 0.0
    %111 = vmatpush1.msra.mxu0 0.0
    %112 = vmatprep.subr.mxu0 0.0
    %113 = vmatpush1.msra.mxu0 0.0
    %114 = vmatprep.subr.mxu0 0.0
    %115 = vmatpush1.msra.mxu0 0.0
    %116 = vmatprep.subr.mxu0 0.0
    %117 = vmatpush1.msra.mxu0 0.0
    %118 = vmatprep.subr.mxu0 0.0
    %119 = vmatpush1.msra.mxu0 0.0
    %120 = vmatprep.subr.mxu0 0.0
    %121 = vmatpush1.msra.mxu0 0.0
    %122 = vmatprep.subr.mxu0 0.0
    %123 = vmatpush1.msra.mxu0 0.0
    %124 = vmatprep.subr.mxu0 0.0
    %125 = vmatpush1.msra.mxu0 0.0
    %126 = vmatprep.subr.mxu0 0.0
    %127 = vmatpush1.msra.mxu0 0.0
    %128 = vmatprep.mubr.f32.mxu0 0.0
    %129 = vmatmul.mubr.f32.gmra.mrb[0].mxu0 %v62
    %v130 = vpop.f32.mrb[0].mxu0
    %v131 = vadd.f32 %v58, %v130
    %v132 = vpop.f32.mrb[0].mxu0
    %133 = vdwg.mxu0
    %v134 = vmax.f32 %v131, 0.0
    %v135 = vld [vmem:[%s3] sm:$0xff]
    %v136 = vmul.f32 %v134, 0.5
    %v137 = vmul.f32 %v136, 1.442695
    %v138 = vpow.pop %v137
    %140 = vrot.lane.b32.xlu0 %v138, 112
    %v141 = vpop.permute.xlu0 %140
    %v143 = vmul.f32 %v135, %v141
    %v144 = vadd.f32 %v143, %v134
    %vm145 = vcmask 130048
    %146 = vst.msk [vmem:[#allocation7] sm:$0xff] %vm145, %v144
    %147 = vst.msk [vmem:[#allocation8] sm:$0xff] %vm145, %v134
    %149 = vrot.lane.b32.xlu0 %v134, 112
    %v150 = vpop.permute.xlu0 %149
    %152 = vst.msk [vmem:[#allocation10] sm:$0xff] %vm145, %v150
    // Predicated region
    $region26: #{conditioning_augment.1} parent=1 // pred_check
      _
    $region27: #{conditioning_augment.1} parent=1 // pred_check_branch
      %154 = sbr.rel (0) target = $region29
    $region28: #{conditioning_augment.1} parent=1 // pred_region
      %s156 = ssub.s32 128, 128
      %157 = vsyncadd [#allocation4], %s156
      %s159 = sshll.u32 [#allocation7], 4
      %s160 = int_to_ptr.vmem [resolvable:$true] %s159
      %162 = dma.vmem_to_hbm [thread:$0]  %s160, 128, %s4, [#allocation4]
    $region29: #{conditioning_augment.1} parent=1 // pred_fallthru
      _
    // Predicated region
    $region30: #{conditioning_augment.1} parent=1 // pred_check
      _
    $region31: #{conditioning_augment.1} parent=1 // pred_check_branch
      %164 = sbr.rel (0) target = $region33
    $region32: #{conditioning_augment.1} parent=1 // pred_region
      %s166 = ssub.s32 128, 128
      %167 = vsyncadd [#allocation9], %s166
      %s169 = sshll.u32 [#allocation8], 4
      %s170 = int_to_ptr.vmem [resolvable:$true] %s169
      %172 = dma.vmem_to_hbm [thread:$0]  %s170, 128, %s5, [#allocation9]
    $region33: #{conditioning_augment.1} parent=1 // pred_fallthru
      _
    // Predicated region
    $region34: #{conditioning_augment.1} parent=1 // pred_check
      _
    $region35: #{conditioning_augment.1} parent=1 // pred_check_branch
      %174 = sbr.rel (0) target = $region37
    $region36: #{conditioning_augment.1} parent=1 // pred_region
      %s176 = ssub.s32 128, 128
      %177 = vsyncadd [#allocation9], %s176
      %s179 = sshll.u32 [#allocation10], 4
      %s180 = int_to_ptr.vmem [resolvable:$true] %s179
      %182 = dma.vmem_to_hbm [thread:$0]  %s180, 128, %s6, [#allocation9]
    $region37: #{conditioning_augment.1} parent=1 // pred_fallthru
      _
    // Predicated region
    $region38: #{conditioning_augment.1} parent=1 // pred_check
      _
    $region39: #{conditioning_augment.1} parent=1 // pred_check_branch
      %184 = sbr.rel (0) target = $region41
    $region40: #{conditioning_augment.1} parent=1 // pred_region
      %185 = dma.done [#allocation4], 128
    $region41: #{conditioning_augment.1} parent=1 // pred_fallthru
      _
    // Predicated region
    $region42: #{conditioning_augment.1} parent=1 // pred_check
      _
    $region43: #{conditioning_augment.1} parent=1 // pred_check_branch
      %187 = sbr.rel (0) target = $region45
    $region44: #{conditioning_augment.1} parent=1 // pred_region
      %188 = dma.done [#allocation9], 128
    $region45: #{conditioning_augment.1} parent=1 // pred_fallthru
      _
    // Predicated region
    $region46: #{conditioning_augment.1} parent=1 // pred_check
      _
    $region47: #{conditioning_augment.1} parent=1 // pred_check_branch
      %190 = sbr.rel (0) target = $region49
    $region48: #{conditioning_augment.1} parent=1 // pred_region
      %191 = dma.done [#allocation9], 128
    $region49: #{conditioning_augment.1} parent=1 // pred_fallthru
      _
    %192 = vsyncpa [#allocation3], 1
    %193 = vsyncpa [#allocation6], 1
    %194 = vsyncpa [#allocation4], 1
    %195 = vsyncpa [#allocation9], 1

</llo_original>
